<compile_context>
chip_gen: v6e
topology: v6e:2x2x1
jax: 0.10.0
libtpu: 0.0.40
codegen_flags: <defaults>
</compile_context>

<pallas_src>
import functools

import jax
import jax.numpy as jnp
from jax.experimental import pallas as pl
from jax.experimental.pallas import tpu as pltpu


def _build_pe_table(max_len: int, d_model: int,
                    dtype=jnp.float32) -> jnp.ndarray:
    """Deterministic sin/cos positional encoding table, shape [max_len, d_model]."""
    assert d_model % 2 == 0, "d_model must be even (same constraint as the PyTorch module)"
    pos = jnp.arange(max_len, dtype=jnp.float32)[:, None]               # [L, 1]
    idx = jnp.arange(0, d_model, 2, dtype=jnp.float32)                  # [D/2]
    div_term = pos / jnp.power(10000.0, idx / float(d_model))           # [L, D/2]
    pe = jnp.zeros((max_len, d_model), dtype=jnp.float32)
    pe = pe.at[:, 0::2].set(jnp.sin(div_term))
    pe = pe.at[:, 1::2].set(jnp.cos(div_term))
    return pe.astype(dtype)


def _sublane_align(dtype) -> int:
    """Sublane packing multiple: 8 for 4-byte, 16 for 2-byte, 32 for 1-byte dtypes."""
    itemsize = jnp.dtype(dtype).itemsize
    return max(8, 32 // max(itemsize, 1))


def _vmem_budget():
    """(target block bytes, vmem_limit_bytes), sized per chip generation."""
    try:
        info = pltpu.get_tpu_info()
        cap = getattr(info, "vmem_capacity_bytes", None)
        if cap is not None and cap >= 100 * 1024 * 1024:   # v5e / v6e: 128 MiB
            return 4 * 1024 * 1024, 64 * 1024 * 1024
    except Exception:
        pass
    # Conservative default (safe on v7x's 64 MiB per-TC VMEM).
    return 2 * 1024 * 1024, 32 * 1024 * 1024


def _choose_tiles(batch: int, seq_len: int, d_model: int, itemsize: int,
                  target_bytes: int, align: int):
    """Pick (seq rows per block, batch rows per block) with block <= ~target_bytes."""
    row_bytes = d_model * itemsize
    max_rows = max(align, target_bytes // row_bytes)
    if max_rows >= seq_len:
        ts = seq_len                                   # whole sequence in one tile
    else:
        ts = (max_rows // align) * align               # aligned, >= align
    block_bytes = max(ts * row_bytes, 1)
    b_tile = int(max(1, min(batch, target_bytes // block_bytes)))
    return ts, b_tile


def _pe_dropout_kernel(seed_ref, x_ref, pe_ref, o_ref, *,
                       p: float, training: bool, tile_s: int, b_tile: int,
                       s_axis: int, b_axis: int):
    # x_ref/o_ref: (b_tile, ts, D); pe_ref: (ts, D) broadcast into the add.
    y = x_ref[...] + pe_ref[...][None, :, :]

    if training and p > 0.0:
        bt, ts, d = y.shape
        s_off = pl.program_id(s_axis) * tile_s
        b_off = pl.program_id(b_axis) * b_tile
        bat_ids = b_off + jax.lax.broadcasted_iota(jnp.int32, (bt, ts, d), 0)
        seq_ids = s_off + jax.lax.broadcasted_iota(jnp.int32, (bt, ts, d), 1)
        col_ids = jax.lax.broadcasted_iota(jnp.int32, (bt, ts, d), 2)
        seed_u32 = seed_ref[0].astype(jnp.uint32)

        # Counter-based murmur3-fmix32: the dropout mask of an element depends
        # only on (batch, seq, col, seed) -> identical regardless of grid/tiling.
        # Batch is mixed separately so there is no S*D*B int32 index wrap.
        h = (seq_ids * d + col_ids).astype(jnp.uint32)
        h = h + bat_ids.astype(jnp.uint32) * jnp.uint32(0x85EBCA6B)
        h = h + seed_u32 * jnp.uint32(0x9E3779B9)
        h = h ^ (h >> 16)
        h = h * jnp.uint32(0x85EBCA6B)
        h = h ^ (h >> 13)
        h = h * jnp.uint32(0xC2B2AE35)
        h = h ^ (h >> 16)

        # Integer threshold: P(drop) = threshold / 2^32 == p (to u32 resolution).
        threshold = jnp.uint32(min(int(round(p * 4294967296.0)), 4294967295))
        keep = h >= threshold
        scale = 1.0 / (1.0 - p)
        o_ref[...] = jnp.where(keep, y * scale, 0.0).astype(o_ref.dtype)
    else:
        o_ref[...] = y.astype(o_ref.dtype)


def positional_encoding_forward(x: jnp.ndarray,
                                pe_table: jnp.ndarray,
                                *,
                                p: float = 0.1,
                                training: bool = True,
                                seed: int = 0,
                                target_block_bytes: int | None = None) -> jnp.ndarray:
    """x: [batch, seq_len, d_model]; pe_table: [max_len, d_model]. Returns x's shape/dtype."""
    B, S, D = x.shape
    assert pe_table.shape[0] >= S and pe_table.shape[1] == D

    align = _sublane_align(x.dtype)
    if target_block_bytes is None:
        target_block_bytes, vmem_limit = _vmem_budget()
    else:
        vmem_limit = 32 * 1024 * 1024

    ts, b_tile = _choose_tiles(B, S, D, jnp.dtype(x.dtype).itemsize,
                               target_block_bytes, align)
    num_s = pl.cdiv(S, ts)
    num_b = pl.cdiv(B, b_tile)

    # Pass the full [max_len, D] PE table (no XLA-side slice/cast).  Only when
    # the whole-sequence tile has an unaligned row count do we need a full-dim
    # block of a sliced table to satisfy the (8, 128) block rule.
    if ts == S and (S % align != 0):
        pe_arg = pe_table[:S, :]
    else:
        pe_arg = pe_table

    # Grid ordering: seq axis outermost (PE block constant across the inner
    # batch loop -> not re-fetched).  If there is only one seq tile, lead with
    # batch so a dual-TC chip (v7x) still gets >= 2 steps on the leading axis.
    if num_s >= 2 or num_b == 1:
        grid = (num_s, num_b)
        s_axis, b_axis = 0, 1
        x_map = lambda s, b, seed_ref: (b, s, 0)
        pe_map = lambda s, b, seed_ref: (s, 0)
    else:
        grid = (num_b, num_s)
        s_axis, b_axis = 1, 0
        x_map = lambda b, s, seed_ref: (b, s, 0)
        pe_map = lambda b, s, seed_ref: (s, 0)

    kernel = functools.partial(_pe_dropout_kernel, p=p, training=training,
                               tile_s=ts, b_tile=b_tile,
                               s_axis=s_axis, b_axis=b_axis)
    seed_arr = jnp.array([seed], dtype=jnp.int32)

    return pl.pallas_call(
        kernel,
        out_shape=jax.ShapeDtypeStruct((B, S, D), x.dtype),
        grid_spec=pltpu.PrefetchScalarGridSpec(
            num_scalar_prefetch=1,                                   # seed -> SMEM
            grid=grid,
            in_specs=[
                pl.BlockSpec((b_tile, ts, D), x_map),                # x tile
                pl.BlockSpec((ts, D), pe_map),                       # PE tile (reused)
            ],
            out_specs=pl.BlockSpec((b_tile, ts, D), x_map),
        ),
        compiler_params=pltpu.CompilerParams(
            dimension_semantics=("parallel", "parallel"),
            vmem_limit_bytes=vmem_limit,
        ),
        # TODO(synk): add input_output_aliases={1: 0} when the caller donates x
        # (in-place update saves the separate output allocation).
    )(seed_arr, x, pe_arg)


if __name__ == "__main__":
    d_model, max_len = 512, 64
    dropout_p = 0.1
    key = jax.random.PRNGKey(0)
    pe_table = _build_pe_table(max_len, d_model)                     # f32, built once

    # Case 1: module-sized small shapes [batch=2, seq_len=8, d_model=512].
    batch, seq_len = 2, 8
    x = jax.random.normal(key, (batch, seq_len, d_model), dtype=jnp.float32)

    out_train = jax.block_until_ready(
        positional_encoding_forward(x, pe_table, p=dropout_p, training=True, seed=0))
    out_eval = jax.block_until_ready(
        positional_encoding_forward(x, pe_table, p=dropout_p, training=False))

    ref = x + pe_table[None, :seq_len, :]
    assert out_train.shape == (batch, seq_len, d_model)
    assert jnp.allclose(out_eval, ref, atol=1e-6, rtol=1e-6)

    # Dropout sanity: kept elements equal (x+pe)/(1-p); keep fraction ~= 1-p.
    keep_mask = out_train != 0.0
    keep_frac = float(jnp.mean(keep_mask.astype(jnp.float32)))
    assert 0.75 <= keep_frac <= 0.99, keep_frac
    scaled_ref = ref / (1.0 - dropout_p)
    assert jnp.allclose(jnp.where(keep_mask, out_train, 0.0),
                        jnp.where(keep_mask, scaled_ref, 0.0),
                        atol=1e-5, rtol=1e-5)

    # Case 2: ragged seq tiles + multi-step grid (exercises cdiv masking, PE
    # reuse across the inner batch loop, and the grid-ordering logic).
    batch2, seq_len2 = 3, 40
    x2 = jax.random.normal(jax.random.PRNGKey(1), (batch2, seq_len2, d_model),
                           dtype=jnp.float32)
    out2 = jax.block_until_ready(
        positional_encoding_forward(x2, pe_table, p=dropout_p, training=False,
                                    target_block_bytes=64 * 1024))
    ref2 = x2 + pe_table[None, :seq_len2, :]
    assert jnp.allclose(out2, ref2, atol=1e-6, rtol=1e-6)

    print("KERNEL_OK")
</pallas_src>

<mosaic_0001>
module attributes {stable_mosaic.version = 11 : i64} {
  func.func @_pe_dropout_kernel(%arg0: i32, %arg1: i32, %arg2: memref<1xi32, #tpu.memory_space<smem>>, %arg3: memref<2x8x512xf32, #tpu.memory_space<vmem>>, %arg4: memref<8x512xf32, #tpu.memory_space<vmem>>, %arg5: memref<2x8x512xf32, #tpu.memory_space<vmem>>) attributes {dimension_semantics = [#tpu.dimension_semantics<parallel>, #tpu.dimension_semantics<parallel>], iteration_bounds = array<i64: 1, 1>, scalar_prefetch = 1 : i64, scratch_operands = 0 : i64, tpu.core_type = #tpu.core_type<tc>, window_params = [{transform_indices = @transform_0, window_bounds = array<i64: 2, 8, 512>}, {transform_indices = @transform_1, window_bounds = array<i64: 8, 512>}, {transform_indices = @transform_2, window_bounds = array<i64: 2, 8, 512>}]} {
    %c0 = arith.constant 0 : index
    %c0_0 = arith.constant 0 : index
    %c0_1 = arith.constant 0 : index
    %0 = vector.load %arg3[%c0, %c0_0, %c0_1] : memref<2x8x512xf32, #tpu.memory_space<vmem>>, vector<2x8x512xf32>
    %c0_2 = arith.constant 0 : index
    %c0_3 = arith.constant 0 : index
    %1 = vector.load %arg4[%c0_2, %c0_3] : memref<8x512xf32, #tpu.memory_space<vmem>>, vector<8x512xf32>
    %2 = vector.shape_cast %1 : vector<8x512xf32> to vector<1x8x512xf32>
    %3 = vector.broadcast %2 : vector<1x8x512xf32> to vector<2x8x512xf32>
    %4 = arith.addf %0, %3 : vector<2x8x512xf32>
    %c8_i32 = arith.constant 8 : i32
    %5 = arith.muli %arg0, %c8_i32 : i32
    %c2_i32 = arith.constant 2 : i32
    %6 = arith.muli %arg1, %c2_i32 : i32
    %7 = tpu.iota {dimensions = array<i32: 0>} : vector<2x8x512xi32>
    %8 = vector.broadcast %6 : i32 to vector<2x8x512xi32>
    %9 = arith.addi %8, %7 : vector<2x8x512xi32>
    %10 = tpu.iota {dimensions = array<i32: 1>} : vector<2x8x512xi32>
    %11 = vector.broadcast %5 : i32 to vector<2x8x512xi32>
    %12 = arith.addi %11, %10 : vector<2x8x512xi32>
    %13 = tpu.iota {dimensions = array<i32: 2>} : vector<2x8x512xi32>
    %c0_4 = arith.constant 0 : index
    %14 = memref.load %arg2[%c0_4] : memref<1xi32, #tpu.memory_space<smem>>
    %c512_i32 = arith.constant 512 : i32
    %15 = vector.broadcast %c512_i32 : i32 to vector<2x8x512xi32>
    %16 = arith.muli %12, %15 : vector<2x8x512xi32>
    %17 = arith.addi %16, %13 : vector<2x8x512xi32>
    %c-2048144789_i32 = arith.constant -2048144789 : i32
    %18 = vector.broadcast %c-2048144789_i32 : i32 to vector<2x8x512xi32>
    %19 = arith.muli %9, %18 : vector<2x8x512xi32>
    %20 = arith.addi %17, %19 : vector<2x8x512xi32>
    %c-1640531527_i32 = arith.constant -1640531527 : i32
    %21 = arith.muli %14, %c-1640531527_i32 : i32
    %22 = vector.broadcast %21 : i32 to vector<2x8x512xi32>
    %23 = arith.addi %20, %22 : vector<2x8x512xi32>
    %c16_i32 = arith.constant 16 : i32
    %24 = vector.broadcast %c16_i32 : i32 to vector<2x8x512xi32>
    %25 = arith.shrui %23, %24 : vector<2x8x512xi32>
    %26 = arith.xori %23, %25 : vector<2x8x512xi32>
    %c-2048144789_i32_5 = arith.constant -2048144789 : i32
    %27 = vector.broadcast %c-2048144789_i32_5 : i32 to vector<2x8x512xi32>
    %28 = arith.muli %26, %27 : vector<2x8x512xi32>
    %c13_i32 = arith.constant 13 : i32
    %29 = vector.broadcast %c13_i32 : i32 to vector<2x8x512xi32>
    %30 = arith.shrui %28, %29 : vector<2x8x512xi32>
    %31 = arith.xori %28, %30 : vector<2x8x512xi32>
    %c-1028477387_i32 = arith.constant -1028477387 : i32
    %32 = vector.broadcast %c-1028477387_i32 : i32 to vector<2x8x512xi32>
    %33 = arith.muli %31, %32 : vector<2x8x512xi32>
    %c16_i32_6 = arith.constant 16 : i32
    %34 = vector.broadcast %c16_i32_6 : i32 to vector<2x8x512xi32>
    %35 = arith.shrui %33, %34 : vector<2x8x512xi32>
    %36 = arith.xori %33, %35 : vector<2x8x512xi32>
    %c429496730_i32 = arith.constant 429496730 : i32
    %37 = vector.broadcast %c429496730_i32 : i32 to vector<2x8x512xi32>
    %38 = arith.cmpi uge, %36, %37 : vector<2x8x512xi32>
    %cst = arith.constant 1.11111116 : f32
    %39 = vector.broadcast %cst : f32 to vector<2x8x512xf32>
    %40 = arith.mulf %4, %39 : vector<2x8x512xf32>
    %cst_7 = arith.constant 0.000000e+00 : f32
    %41 = vector.broadcast %cst_7 : f32 to vector<2x8x512xf32>
    %42 = arith.select %38, %40, %41 : vector<2x8x512xi1>, vector<2x8x512xf32>
    %c0_8 = arith.constant 0 : index
    %c0_9 = arith.constant 0 : index
    %c0_10 = arith.constant 0 : index
    %43 = vector.load %arg5[%c0_8, %c0_9, %c0_10] : memref<2x8x512xf32, #tpu.memory_space<vmem>>, vector<2x8x512xf32>
    tpu.vector_store %arg5[%c0_8, %c0_9, %c0_10], %42 {strides = array<i32>} : memref<2x8x512xf32, #tpu.memory_space<vmem>>, vector<2x8x512xf32>,
    return
  }
  func.func @transform_0(%arg0: i32, %arg1: i32, %arg2: memref<1xi32, #tpu.memory_space<smem>>) -> (i32, i32, i32) {
    %c0_i32 = arith.constant 0 : i32
    %c0_i32_0 = arith.constant 0 : i32
    return %arg1, %arg0, %c0_i32 : i32, i32, i32
  }
  func.func @transform_1(%arg0: i32, %arg1: i32, %arg2: memref<1xi32, #tpu.memory_space<smem>>) -> (i32, i32) {
    %c0_i32 = arith.constant 0 : i32
    %c0_i32_0 = arith.constant 0 : i32
    return %arg0, %c0_i32 : i32, i32
  }
  func.func @transform_2(%arg0: i32, %arg1: i32, %arg2: memref<1xi32, #tpu.memory_space<smem>>) -> (i32, i32, i32) {
    %c0_i32 = arith.constant 0 : i32
    %c0_i32_0 = arith.constant 0 : i32
    return %arg1, %arg0, %c0_i32 : i32, i32, i32
  }
}

</mosaic_0001>

<llo_original>
// kernel: tpu_custom_call.1
$region0: #{tpu_custom_call.1}
  #allocation0 [shape = 'u32[]', space=smem, size = 0x4, offset = 0x4, fixed_abs, tag = 'smem constant byte address 0x4 - core index']
  #allocation1 [shape = 'u32[144,128]{1,0:T(1,128)}', space=vmem, size = 0x12000, scoped, tag = 'internal scratch']
  #allocation2 [shape = 's32[1]{0}', space=sflag, size = 0x4, scoped, tag = 'scoped memory for tpu_custom_call.1']
  #allocation3 [shape = 's32[1]{0:T(128)S(6)}', space=smem, size = 0x200, scoped, tag = 'prefetched SMEM operand 0']
  %s0 = inlined_call_operand.<no memory space> [shape: s32[1], index: 0, kind: input, shape index: {}]
  %s1 = inlined_call_operand.hbm [shape: f32[2,8,512], index: 1, kind: input, shape index: {}]
  %s2 = inlined_call_operand.hbm [shape: f32[64,512], index: 2, kind: input, shape index: {}]
  %s3 = inlined_call_operand.hbm [shape: f32[2,8,512], index: 3, kind: output, shape index: {}]
  %s4 = sld [smem:[#allocation0]]
  $region26: #{tpu_custom_call.1} parent=0
    _
  %s6 = ssub.s32 1, %s4
  %s7 = scalar_select 0, %s6, %s4
  %8 = sst [smem:[#allocation3]] %s0
  $region1: #{tpu_custom_call.1} parent=0
    #allocation4 [shape = 'u8[32768]{0}', space=vmem, size = 0x8000, scoped, tag = 'input window, operand 1, single buffered']
    #allocation5 [shape = 's32[1]{0}', space=sflag, size = 0x4, scoped, tag = 'scoped memory for tpu_custom_call.1']
    #allocation6 [shape = 's32[1]{0}', space=sflag, size = 0x4, scoped, tag = 'scoped memory for tpu_custom_call.1']
    #allocation7 [shape = 'u8[16384]{0}', space=vmem, size = 0x4000, scoped, tag = 'input window, operand 2, single buffered']
    #allocation8 [shape = 's32[1]{0}', space=sflag, size = 0x4, scoped, tag = 'scoped memory for tpu_custom_call.1']
    #allocation9 [shape = 'u8[32768]{0}', space=vmem, size = 0x8000, scoped, tag = 'output window, operand 0, single buffered']
    %9 = vsyncpa [#allocation5], 0
    %10 = vsyncpa [#allocation8], 0
    %11 = vsyncpa [#allocation6], 0
    // Predicated region
    $region2: #{tpu_custom_call.1} parent=1 // pred_check
      _
    $region3: #{tpu_custom_call.1} parent=1 // pred_check_branch
      %13 = sbr.rel (0) target = $region5
    $region4: #{tpu_custom_call.1} parent=1 // pred_region
      %s15 = ssub.s32 1024, 1024
      %16 = vsyncadd [#allocation5], %s15
      %s17 = sshll.u32 [#allocation4], 4
      %s18 = int_to_ptr.vmem [resolvable:$true] %s17
      %23 = dma.hbm_to_vmem [thread:$0]  %s1, 1024, %s18, [#allocation5], 512, 512, 32
    $region5: #{tpu_custom_call.1} parent=1 // pred_fallthru
      _
    // Predicated region
    $region6: #{tpu_custom_call.1} parent=1 // pred_check
      _
    $region7: #{tpu_custom_call.1} parent=1 // pred_check_branch
      %25 = sbr.rel (0) target = $region9
    $region8: #{tpu_custom_call.1} parent=1 // pred_region
      %s27 = ssub.s32 512, 512
      %28 = vsyncadd [#allocation8], %s27
      %s30 = sshll.u32 [#allocation7], 4
      %s31 = int_to_ptr.vmem [resolvable:$true] %s30
      %33 = dma.hbm_to_vmem [thread:$0]  %s2, 512, %s31, [#allocation8]
    $region9: #{tpu_custom_call.1} parent=1 // pred_fallthru
      _
    // Predicated region
    $region10: #{tpu_custom_call.1} parent=1 // pred_check
      _
    $region11: #{tpu_custom_call.1} parent=1 // pred_check_branch
      %35 = sbr.rel (0) target = $region13
    $region12: #{tpu_custom_call.1} parent=1 // pred_region
      %36 = dma.done [#allocation5], 1024
    $region13: #{tpu_custom_call.1} parent=1 // pred_fallthru
      _
    // Predicated region
    $region14: #{tpu_custom_call.1} parent=1 // pred_check
      _
    $region15: #{tpu_custom_call.1} parent=1 // pred_check_branch
      %38 = sbr.rel (0) target = $region17
    $region16: #{tpu_custom_call.1} parent=1 // pred_region
      %39 = dma.done [#allocation8], 512
    $region17: #{tpu_custom_call.1} parent=1 // pred_fallthru
      _
    %v40 = vld [vmem:[#allocation4] sm:$0xff]
    %v41 = vld [vmem:[#allocation4 + $0x8] sm:$0xff]
    %v42 = vld [vmem:[#allocation4 + $0x10] sm:$0xff]
    %v43 = vld [vmem:[#allocation4 + $0x18] sm:$0xff]
    %v44 = vld [vmem:[#allocation4 + $0x20] sm:$0xff]
    %v45 = vld [vmem:[#allocation4 + $0x28] sm:$0xff]
    %v46 = vld [vmem:[#allocation4 + $0x30] sm:$0xff]
    %v47 = vld [vmem:[#allocation4 + $0x38] sm:$0xff]
    %v48 = vld [vmem:[#allocation7] sm:$0xff]
    %v49 = vld [vmem:[#allocation7 + $0x8] sm:$0xff]
    %v50 = vld [vmem:[#allocation7 + $0x10] sm:$0xff]
    %v51 = vld [vmem:[#allocation7 + $0x18] sm:$0xff]
    %v52 = vadd.f32 %v40, %v48
    %v53 = vadd.f32 %v41, %v49
    %v54 = vadd.f32 %v42, %v50
    %v55 = vadd.f32 %v43, %v51
    %v56 = vadd.f32 %v44, %v48
    %v57 = vadd.f32 %v45, %v49
    %v58 = vadd.f32 %v46, %v50
    %v59 = vadd.f32 %v47, %v51
    %s60 = smul.u32 0, 8
    %s61 = smul.u32 0, 2
    %v62 = vstv %s61
    %v63 = vadd.s32 %v62, 1
    %v64 = vlaneseq
    %v65 = vshrl.u32 %v64, 7
    %v66 = vstv %s60
    %v67 = vadd.s32 %v66, %v65
    %v68 = vlaneseq
    %v69 = vand.u32 %v68, 127
    %v70 = vadd.s32 %v69, 128
    %v71 = vadd.s32 %v69, 256
    %v72 = vadd.s32 %v69, 384
    %s73 = sld [smem:[#allocation3]]
    %v74 = vmul.u32 %v67, 512
    %v75 = vadd.s32 %v74, %v69
    %v76 = vadd.s32 %v74, %v70
    %v77 = vadd.s32 %v74, %v71
    %v78 = vadd.s32 %v74, %v72
    %v79 = vmul.u32 %v62, 2246822507
    %v80 = vmul.u32 %v63, 2246822507
    %v81 = vadd.s32 %v75, %v79
    %v82 = vadd.s32 %v76, %v79
    %v83 = vadd.s32 %v77, %v79
    %v84 = vadd.s32 %v78, %v79
    %v85 = vadd.s32 %v75, %v80
    %v86 = vadd.s32 %v76, %v80
    %v87 = vadd.s32 %v77, %v80
    %v88 = vadd.s32 %v78, %v80
    %s89 = smul.u32 %s73, 2654435769
    %v90 = vstv %s89
    %v91 = vadd.s32 %v81, %v90
    %v92 = vadd.s32 %v82, %v90
    %v93 = vadd.s32 %v83, %v90
    %v94 = vadd.s32 %v84, %v90
    %v95 = vadd.s32 %v85, %v90
    %v96 = vadd.s32 %v86, %v90
    %v97 = vadd.s32 %v87, %v90
    %v98 = vadd.s32 %v88, %v90
    %v99 = vshrl.u32 %v91, 16
    %v100 = vshrl.u32 %v92, 16
    %v101 = vshrl.u32 %v93, 16
    %v102 = vshrl.u32 %v94, 16
    %v103 = vshrl.u32 %v95, 16
    %v104 = vshrl.u32 %v96, 16
    %v105 = vshrl.u32 %v97, 16
    %v106 = vshrl.u32 %v98, 16
    %v107 = vxor.u32 %v91, %v99
    %v108 = vxor.u32 %v92, %v100
    %v109 = vxor.u32 %v93, %v101
    %v110 = vxor.u32 %v94, %v102
    %v111 = vxor.u32 %v95, %v103
    %v112 = vxor.u32 %v96, %v104
    %v113 = vxor.u32 %v97, %v105
    %v114 = vxor.u32 %v98, %v106
    %v115 = vmul.u32 %v107, 2246822507
    %v116 = vmul.u32 %v108, 2246822507
    %v117 = vmul.u32 %v109, 2246822507
    %v118 = vmul.u32 %v110, 2246822507
    %v119 = vmul.u32 %v111, 2246822507
    %v120 = vmul.u32 %v112, 2246822507
    %v121 = vmul.u32 %v113, 2246822507
    %v122 = vmul.u32 %v114, 2246822507
    %v123 = vshrl.u32 %v115, 13
    %v124 = vshrl.u32 %v116, 13
    %v125 = vshrl.u32 %v117, 13
    %v126 = vshrl.u32 %v118, 13
    %v127 = vshrl.u32 %v119, 13
    %v128 = vshrl.u32 %v120, 13
    %v129 = vshrl.u32 %v121, 13
    %v130 = vshrl.u32 %v122, 13
    %v131 = vxor.u32 %v115, %v123
    %v132 = vxor.u32 %v116, %v124
    %v133 = vxor.u32 %v117, %v125
    %v134 = vxor.u32 %v118, %v126
    %v135 = vxor.u32 %v119, %v127
    %v136 = vxor.u32 %v120, %v128
    %v137 = vxor.u32 %v121, %v129
    %v138 = vxor.u32 %v122, %v130
    %v139 = vmul.u32 %v131, 3266489909
    %v140 = vmul.u32 %v132, 3266489909
    %v141 = vmul.u32 %v133, 3266489909
    %v142 = vmul.u32 %v134, 3266489909
    %v143 = vmul.u32 %v135, 3266489909
    %v144 = vmul.u32 %v136, 3266489909
    %v145 = vmul.u32 %v137, 3266489909
    %v146 = vmul.u32 %v138, 3266489909
    %v147 = vshrl.u32 %v139, 16
    %v148 = vshrl.u32 %v140, 16
    %v149 = vshrl.u32 %v141, 16
    %v150 = vshrl.u32 %v142, 16
    %v151 = vshrl.u32 %v143, 16
    %v152 = vshrl.u32 %v144, 16
    %v153 = vshrl.u32 %v145, 16
    %v154 = vshrl.u32 %v146, 16
    %v155 = vxor.u32 %v139, %v147
    %v156 = vxor.u32 %v140, %v148
    %v157 = vxor.u32 %v141, %v149
    %v158 = vxor.u32 %v142, %v150
    %v159 = vxor.u32 %v143, %v151
    %v160 = vxor.u32 %v144, %v152
    %v161 = vxor.u32 %v145, %v153
    %v162 = vxor.u32 %v146, %v154
    %vm163 = vcmp.ge.u32.totalorder %v155, 429496730
    %vm164 = vcmp.ge.u32.totalorder %v156, 429496730
    %vm165 = vcmp.ge.u32.totalorder %v157, 429496730
    %vm166 = vcmp.ge.u32.totalorder %v158, 429496730
    %vm167 = vcmp.ge.u32.totalorder %v159, 429496730
    %vm168 = vcmp.ge.u32.totalorder %v160, 429496730
    %vm169 = vcmp.ge.u32.totalorder %v161, 429496730
    %vm170 = vcmp.ge.u32.totalorder %v162, 429496730
    %v171 = vmul.f32 %v52, 1.1111112
    %v172 = vmul.f32 %v53, 1.1111112
    %v173 = vmul.f32 %v54, 1.1111112
    %v174 = vmul.f32 %v55, 1.1111112
    %v175 = vmul.f32 %v56, 1.1111112
    %v176 = vmul.f32 %v57, 1.1111112
    %v177 = vmul.f32 %v58, 1.1111112
    %v178 = vmul.f32 %v59, 1.1111112
    %v179 = vsel %vm163, %v171, 0.0
    %v180 = vsel %vm164, %v172, 0.0
    %v181 = vsel %vm165, %v173, 0.0
    %v182 = vsel %vm166, %v174, 0.0
    %v183 = vsel %vm167, %v175, 0.0
    %v184 = vsel %vm168, %v176, 0.0
    %v185 = vsel %vm169, %v177, 0.0
    %v186 = vsel %vm170, %v178, 0.0
    %187 = vst [vmem:[#allocation9] sm:$0xff] %v179
    %188 = vst [vmem:[#allocation9 + $0x8] sm:$0xff] %v180
    %189 = vst [vmem:[#allocation9 + $0x10] sm:$0xff] %v181
    %190 = vst [vmem:[#allocation9 + $0x18] sm:$0xff] %v182
    %191 = vst [vmem:[#allocation9 + $0x20] sm:$0xff] %v183
    %192 = vst [vmem:[#allocation9 + $0x28] sm:$0xff] %v184
    %193 = vst [vmem:[#allocation9 + $0x30] sm:$0xff] %v185
    %194 = vst [vmem:[#allocation9 + $0x38] sm:$0xff] %v186
    // Predicated region
    $region18: #{tpu_custom_call.1} parent=1 // pred_check
      _
    $region19: #{tpu_custom_call.1} parent=1 // pred_check_branch
      %196 = sbr.rel (0) target = $region21
    $region20: #{tpu_custom_call.1} parent=1 // pred_region
      %s198 = ssub.s32 1024, 1024
      %199 = vsyncadd [#allocation6], %s198
      %s200 = sshll.u32 [#allocation9], 4
      %s201 = int_to_ptr.vmem [resolvable:$true] %s200
      %206 = dma.vmem_to_hbm [thread:$0]  %s201, 1024, %s3, [#allocation6], 512, 512, 32
    $region21: #{tpu_custom_call.1} parent=1 // pred_fallthru
      _
    // Predicated region
    $region22: #{tpu_custom_call.1} parent=1 // pred_check
      _
    $region23: #{tpu_custom_call.1} parent=1 // pred_check_branch
      %208 = sbr.rel (0) target = $region25
    $region24: #{tpu_custom_call.1} parent=1 // pred_region
      %209 = dma.done [#allocation6], 1024
    $region25: #{tpu_custom_call.1} parent=1 // pred_fallthru
      _
    %210 = vsyncpa [#allocation5], 1
    %211 = vsyncpa [#allocation8], 1
    %212 = vsyncpa [#allocation6], 1

</llo_original>
